<compile_context>
chip_gen: v7x
topology: tpu7x:2x2x1
jax: 0.10.0
libtpu: 0.0.40
codegen_flags: <defaults>
</compile_context>

<pallas_src>
import functools

import jax
import jax.numpy as jnp
from jax.experimental import pallas as pl
from jax.experimental.pallas import tpu as pltpu


def _lsn_kernel(x_ref, *out_refs, library_size, posinf, neginf,
                compute_dtype, emit_scale):
    # x_ref: (TB, G) tile of the input. out_refs = (out_ref,) or (out_ref, scale_ref).
    out_ref = out_refs[0]
    x = x_ref[...]
    # Row sums accumulate in f32 (accuracy for bf16/int counts) without
    # materializing an f32 copy of the whole tile.
    sigmas = jnp.sum(x, axis=1, dtype=jnp.float32, keepdims=True)     # (TB, 1)
    scale = library_size / sigmas                                     # +inf on all-zero rows

    xc = x.astype(compute_dtype)                                      # no-op for float inputs
    y = xc * scale.astype(compute_dtype)                              # broadcast over lanes

    # nan_to_num(..., nan=0) semantics for finite inputs: NaN/Inf only appear
    # on sigma == 0 rows (x * inf), where x==0 -> 0, x>0 -> +max, x<0 -> -max.
    pos_c = jnp.asarray(posinf, compute_dtype)
    neg_c = jnp.asarray(neginf, compute_dtype)
    zero_c = jnp.zeros_like(xc)
    zero_row = sigmas == jnp.float32(0.0)                             # (TB, 1)
    fill = jnp.where(xc > 0, pos_c, jnp.where(xc < 0, neg_c, zero_c))
    y = jnp.where(zero_row, fill, y)

    out_ref[...] = y.astype(out_ref.dtype)
    if emit_scale:
        out_refs[1][...] = scale                                      # raw (possibly inf) scale


def _round_up(x: int, m: int) -> int:
    return (x + m - 1) // m * m


def _sublane_rows(dtype) -> int:
    # f32 -> 8, bf16/f16 -> 16, int8/fp8 -> 32 (sub-32-bit dtypes pack sublanes).
    itemsize = jnp.dtype(dtype).itemsize
    return max(8, 32 // max(1, itemsize))


def _choose_block_rows(n: int, g: int, in_itemsize: int, out_itemsize: int,
                       sublane: int) -> int:
    # Streaming roofline saturates by ~512-row tiles; target ~4 MiB of input
    # per grid step and keep >= 8 grid steps whenever the batch allows so the
    # pipeline has steps to overlap and v7x's two TensorCores each get >= 4
    # steps of the "parallel" axis.
    bytes_per_row = g * max(in_itemsize, out_itemsize)
    rows = max(sublane, min(512, (4 << 20) // max(1, bytes_per_row)))
    min_steps = 8
    rows = min(rows, max(sublane, pl.cdiv(n, min_steps)))
    rows = max(sublane, (rows // sublane) * sublane)
    return min(rows, max(sublane, _round_up(n, sublane)))


def lsn_forward(x: jax.Array, library_size: int, *,
                block_rows: int | None = None, return_scale: bool = False):
    """Library-size normalization. Returns `out` or `(out, scale)`."""
    if x.ndim != 2:
        raise ValueError(f"LSN expects a (cells, genes) matrix, got {x.shape}")
    n, g = x.shape
    in_dtype = x.dtype
    out_dtype = in_dtype if jnp.issubdtype(in_dtype, jnp.floating) else jnp.float32
    in_itemsize = jnp.dtype(in_dtype).itemsize
    out_itemsize = jnp.dtype(out_dtype).itemsize
    sublane = max(_sublane_rows(in_dtype), _sublane_rows(out_dtype))

    if block_rows is None:
        block_rows = _choose_block_rows(n, g, in_itemsize, out_itemsize, sublane)
    else:
        block_rows = max(sublane, _round_up(int(block_rows), sublane))

    grid = pl.cdiv(n, block_rows)   # partial last block: OOB writes are masked

    # Scoped-VMEM limit: double-buffered I/O tiles + f32 row-sum temporaries
    # + headroom, capped at 48 MiB (safe on v7x's 64 MiB physical VMEM).
    tile_in = block_rows * g * in_itemsize
    tile_out = block_rows * g * out_itemsize
    temps = 2 * block_rows * g * 4
    vmem_limit = 2 * (tile_in + tile_out) + temps + (4 << 20)
    vmem_limit = int(min(max(vmem_limit, 16 << 20), 48 << 20))

    finfo = jnp.finfo(out_dtype)
    kernel = functools.partial(
        _lsn_kernel,
        library_size=float(library_size),
        posinf=float(finfo.max),
        neginf=float(finfo.min),
        compute_dtype=out_dtype,
        emit_scale=return_scale,
    )

    if return_scale:
        out_shape = (jax.ShapeDtypeStruct((n, g), out_dtype),
                     jax.ShapeDtypeStruct((n, 1), jnp.float32))
        out_specs = [pl.BlockSpec((block_rows, g), lambda i: (i, 0)),
                     pl.BlockSpec((block_rows, 1), lambda i: (i, 0))]
    else:
        out_shape = jax.ShapeDtypeStruct((n, g), out_dtype)
        out_specs = pl.BlockSpec((block_rows, g), lambda i: (i, 0))

    result = pl.pallas_call(
        kernel,
        out_shape=out_shape,
        grid_spec=pltpu.PrefetchScalarGridSpec(
            num_scalar_prefetch=0,
            grid=(grid,),
            in_specs=[pl.BlockSpec((block_rows, g), lambda i: (i, 0))],
            out_specs=out_specs,
        ),
        compiler_params=pltpu.CompilerParams(
            dimension_semantics=("parallel",),
            vmem_limit_bytes=vmem_limit,
        ),
    )(x)

    if return_scale:
        out, scale = result
        return out, scale[:, 0]
    return result


def lsn_reference(x: jax.Array, library_size: int):
    """Pure-JAX reference mirroring the PyTorch forward."""
    out_dtype = x.dtype if jnp.issubdtype(x.dtype, jnp.floating) else jnp.float32
    sigmas = jnp.sum(x.astype(jnp.float32), axis=1)
    scale = library_size / sigmas
    y = x.astype(out_dtype) * scale[:, None].astype(out_dtype)
    finfo = jnp.finfo(out_dtype)
    y = jnp.nan_to_num(y, nan=0.0, posinf=float(finfo.max), neginf=float(finfo.min))
    return y, scale


if __name__ == "__main__":
    key = jax.random.PRNGKey(0)
    k1, k2, k3 = jax.random.split(key, 3)
    LIBRARY_SIZE = 20000

    # --- Test 1: small f32 batch, non-multiple-of-8 rows (exercises the
    # partial last block), one all-zero row (div-by-zero path), scale out. ---
    N, G = 10, 256
    x = jax.random.uniform(k1, (N, G), dtype=jnp.float32, minval=0.0, maxval=5.0)
    x = x.at[3, :].set(0.0)
    out, scale = lsn_forward(x, LIBRARY_SIZE, return_scale=True)
    out = jax.block_until_ready(out)
    scale = jax.block_until_ready(scale)
    ref_out, ref_scale = lsn_reference(x, LIBRARY_SIZE)

    assert out.shape == x.shape and out.dtype == x.dtype
    assert jnp.allclose(out, ref_out, rtol=1e-5, atol=1e-5)
    row_sums = jnp.sum(out, axis=1)
    keep = jnp.arange(N) != 3
    assert jnp.allclose(row_sums[keep], LIBRARY_SIZE, rtol=1e-4)
    assert jnp.allclose(row_sums[3], 0.0)
    fin = jnp.isfinite(ref_scale)
    assert bool(jnp.all(jnp.isfinite(scale) == fin))
    assert jnp.allclose(scale[fin], ref_scale[fin], rtol=1e-5, atol=1e-5)

    # --- Test 2: multi-step grid via block_rows override, partial last block,
    # gene count not a multiple of 128; module-default (no scale) output. ---
    N2, G2 = 300, 200
    x2 = jax.random.uniform(k2, (N2, G2), dtype=jnp.float32, minval=0.0, maxval=3.0)
    out2 = lsn_forward(x2, LIBRARY_SIZE, block_rows=128)
    out2 = jax.block_until_ready(out2)
    ref_out2, _ = lsn_reference(x2, LIBRARY_SIZE)
    assert out2.shape == x2.shape
    assert jnp.allclose(out2, ref_out2, rtol=1e-5, atol=1e-5)

    # --- Test 3: bf16 path (native bf16 multiply/select, f32 row sums). ---
    N3, G3 = 64, 384
    x3 = jax.random.uniform(k3, (N3, G3), dtype=jnp.float32,
                            minval=0.0, maxval=4.0).astype(jnp.bfloat16)
    out3, scale3 = lsn_forward(x3, LIBRARY_SIZE, return_scale=True)
    out3 = jax.block_until_ready(out3)
    ref_out3, ref_scale3 = lsn_reference(x3, LIBRARY_SIZE)
    assert out3.dtype == jnp.bfloat16 and out3.shape == x3.shape
    assert jnp.allclose(out3.astype(jnp.float32), ref_out3.astype(jnp.float32),
                        rtol=2e-2, atol=2e-2)
    assert jnp.allclose(scale3, ref_scale3, rtol=1e-3, atol=1e-3)

    print("KERNEL_OK")
</pallas_src>

<mosaic_0001>
module attributes {stable_mosaic.version = 11 : i64} {
  func.func @_lsn_kernel(%arg0: i32, %arg1: memref<8x256xf32, #tpu.memory_space<vmem>>, %arg2: memref<8x256xf32, #tpu.memory_space<vmem>>, %arg3: memref<8x1xf32, #tpu.memory_space<vmem>>) attributes {dimension_semantics = [#tpu.dimension_semantics<parallel>], iteration_bounds = array<i64: 2>, scalar_prefetch = 0 : i64, scratch_operands = 0 : i64, tpu.core_type = #tpu.core_type<tc>, window_params = [{transform_indices = @transform_0, window_bounds = array<i64: 8, 256>}, {transform_indices = @transform_1, window_bounds = array<i64: 8, 256>}, {transform_indices = @transform_2, window_bounds = array<i64: 8, 1>}]} {
    %c0 = arith.constant 0 : index
    %c0_0 = arith.constant 0 : index
    %0 = vector.load %arg1[%c0, %c0_0] : memref<8x256xf32, #tpu.memory_space<vmem>>, vector<8x256xf32>
    %cst = arith.constant dense<0.000000e+00> : vector<8xf32>
    %1 = vector.multi_reduction <add>, %0, %cst [1] : vector<8x256xf32> to vector<8xf32>
    %2 = vector.shape_cast %1 : vector<8xf32> to vector<8x1xf32>
    %cst_1 = arith.constant 2.000000e+04 : f32
    %3 = vector.broadcast %cst_1 : f32 to vector<8x1xf32>
    %4 = arith.divf %3, %2 : vector<8x1xf32>
    %5 = vector.broadcast %4 : vector<8x1xf32> to vector<8x256xf32>
    %6 = arith.mulf %0, %5 : vector<8x256xf32>
    %cst_2 = arith.constant 0.000000e+00 : f32
    %7 = vector.broadcast %cst_2 : f32 to vector<8x256xf32>
    %cst_3 = arith.constant 0.000000e+00 : f32
    %8 = vector.broadcast %cst_3 : f32 to vector<8x1xf32>
    %9 = arith.cmpf oeq, %2, %8 : vector<8x1xf32>
    %cst_4 = arith.constant 0.000000e+00 : f32
    %10 = vector.broadcast %cst_4 : f32 to vector<8x256xf32>
    %11 = arith.cmpf ogt, %0, %10 : vector<8x256xf32>
    %cst_5 = arith.constant 0.000000e+00 : f32
    %12 = vector.broadcast %cst_5 : f32 to vector<8x256xf32>
    %13 = arith.cmpf olt, %0, %12 : vector<8x256xf32>
    %cst_6 = arith.constant -3.40282347E+38 : f32
    %14 = vector.broadcast %cst_6 : f32 to vector<8x256xf32>
    %15 = arith.select %13, %14, %7 : vector<8x256xi1>, vector<8x256xf32>
    %cst_7 = arith.constant 3.40282347E+38 : f32
    %16 = vector.broadcast %cst_7 : f32 to vector<8x256xf32>
    %17 = arith.select %11, %16, %15 : vector<8x256xi1>, vector<8x256xf32>
    %18 = vector.shape_cast %9 : vector<8x1xi1> to vector<8x1xi1>
    %19 = vector.broadcast %18 : vector<8x1xi1> to vector<8x256xi1>
    %20 = arith.select %19, %17, %6 : vector<8x256xi1>, vector<8x256xf32>
    %c0_8 = arith.constant 0 : index
    %c0_9 = arith.constant 0 : index
    %21 = vector.load %arg2[%c0_8, %c0_9] : memref<8x256xf32, #tpu.memory_space<vmem>>, vector<8x256xf32>
    tpu.vector_store %arg2[%c0_8, %c0_9], %20 {strides = array<i32>} : memref<8x256xf32, #tpu.memory_space<vmem>>, vector<8x256xf32>,
    %c0_10 = arith.constant 0 : index
    %c0_11 = arith.constant 0 : index
    %22 = vector.load %arg3[%c0_10, %c0_11] : memref<8x1xf32, #tpu.memory_space<vmem>>, vector<8x1xf32>
    tpu.vector_store %arg3[%c0_10, %c0_11], %4 {strides = array<i32>} : memref<8x1xf32, #tpu.memory_space<vmem>>, vector<8x1xf32>,
    return
  }
  func.func @transform_0(%arg0: i32) -> (i32, i32) {
    %c0_i32 = arith.constant 0 : i32
    %c0_i32_0 = arith.constant 0 : i32
    return %arg0, %c0_i32 : i32, i32
  }
  func.func @transform_1(%arg0: i32) -> (i32, i32) {
    %c0_i32 = arith.constant 0 : i32
    %c0_i32_0 = arith.constant 0 : i32
    return %arg0, %c0_i32 : i32, i32
  }
  func.func @transform_2(%arg0: i32) -> (i32, i32) {
    %c0_i32 = arith.constant 0 : i32
    %c0_i32_0 = arith.constant 0 : i32
    return %arg0, %c0_i32 : i32, i32
  }
}

</mosaic_0001>

<llo_original>
// kernel: tpu_custom_call.1
$region0: #{tpu_custom_call.1}
  #allocation0 [shape = 'u32[]', space=smem, size = 0x4, offset = 0x4, fixed_abs, tag = 'smem constant byte address 0x4 - core index']
  #allocation1 [shape = 'u32[144,128]{1,0:T(1,128)}', space=vmem, size = 0x12000, scoped, tag = 'internal scratch']
  %s0 = inlined_call_operand.hbm [shape: f32[10,256], index: 0, kind: input, shape index: {}]
  %s1 = inlined_call_operand.hbm [shape: f32[10,256], index: 1, kind: output, shape index: {0}]
  %s2 = inlined_call_operand.vmem [shape: f32[10,1], index: 2, kind: output, shape index: {1}]
  %3 = xla_tuple %s1, %s2
  %s4 = sld [smem:[#allocation0]]
  $region49: #{tpu_custom_call.1} parent=0
    _
  %s6 = ssub.s32 1, %s4
  %s7 = scalar_select 0, %s6, %s4
  $region1: #{tpu_custom_call.1} parent=0
    #allocation2 [shape = 'u8[16384]{0}', space=vmem, size = 0x4000, scoped, tag = 'input window, operand 0']
    #allocation3 [shape = 's32[2]{0}', space=sflag, size = 0x8, scoped, tag = 'scoped memory for tpu_custom_call.1']
    #allocation4 [shape = 's32[2]{0}', space=sflag, size = 0x8, scoped, tag = 'scoped memory for tpu_custom_call.1']
    #allocation5 [shape = 'u8[16384]{0}', space=vmem, size = 0x4000, scoped, tag = 'output window, operand 0']
    %8 = vsyncpa [#allocation3], 0
    %s9 = scalar_lea.sflag [#allocation3], 1
    %10 = vsyncpa %s9, 0
    %11 = vsyncpa [#allocation4], 0
    %s12 = scalar_lea.sflag [#allocation4], 1
    %13 = vsyncpa %s12, 0
    loop: start=0, step=1, limit=4
    $region2: #{tpu_custom_call.1} parent=1 // loop_pre_header
      _
    $region3: #{tpu_custom_call.1} parent=1 // loop_header
      %s15 = sphi 0, %s19
      %p16 = scmp.ge.s32.totalorder %s15, 4
      %s25 = sphi 0, %s27
      %s28 = sphi 0, %s25
      %s29 = sphi 0, %s28
      %s45 = sphi 0, %s29
      %s51 = sphi 0, %s53
      %s54 = sphi 0, %s51
      %s55 = sphi 0, %s54
      %s71 = sphi 0, %s55
      %s77 = sphi 0, %s79
      %s80 = sphi 0, %s77
      %s81 = sphi 0, %s80
      %s97 = sphi 0, %s81
    $region4: #{tpu_custom_call.1} parent=1 // loop_header_branch
      %18 = sbr.rel (%p16) target = $region8
    $region5: #{tpu_custom_call.1} parent=1 // loop_body
      %s20 = ssub.s32 %s15, 1
      %s21 = ssub.s32 %s15, 2
      %s22 = sadd.s32 %s15, 1
      %s23 = ssub.s32 %s15, %s22
      %p24 = scmp.eq.s32.totalorder %s23, 0
      %s26 = sadd.s32 %s25, 1
      %s27 = scalar_select %p24, %s25, %s26
      %p30 = pneg %p24
      %p31 = scmp.eq.s32.totalorder %s15, 1
      %p32 = por %p30, %p31
      %p33 = scmp.ne.s32.totalorder %s25, %s28
      %p34 = scmp.eq.s32.totalorder %s15, 0
      %p35 = por %p33, %p34
      %p36 = scmp.ne.s32.totalorder %s25, %s28
      %p37 = scmp.eq.s32.totalorder %s20, 1
      %p38 = por %p36, %p37
      %p39 = scmp.ne.s32.totalorder %s28, %s29
      %p40 = scmp.eq.s32.totalorder %s20, 0
      %p41 = por %p39, %p40
      %p42 = scmp.ne.s32.totalorder %s28, %s29
      %p43 = scmp.eq.s32.totalorder %s21, 1
      %p44 = por %p42, %p43
      %p46 = scmp.ne.s32.totalorder %s29, %s45
      %p47 = scmp.eq.s32.totalorder %s21, 0
      %p48 = por %p46, %p47
      %s49 = ssub.s32 %s15, %s22
      %p50 = scmp.eq.s32.totalorder %s49, 0
      %s52 = sadd.s32 %s51, 1
      %s53 = scalar_select %p50, %s51, %s52
      %p56 = pneg %p50
      %p57 = scmp.eq.s32.totalorder %s15, 1
      %p58 = por %p56, %p57
      %p59 = scmp.ne.s32.totalorder %s51, %s54
      %p60 = scmp.eq.s32.totalorder %s15, 0
      %p61 = por %p59, %p60
      %p62 = scmp.ne.s32.totalorder %s51, %s54
      %p63 = scmp.eq.s32.totalorder %s20, 1
      %p64 = por %p62, %p63
      %p65 = scmp.ne.s32.totalorder %s54, %s55
      %p66 = scmp.eq.s32.totalorder %s20, 0
      %p67 = por %p65, %p66
      %p68 = scmp.ne.s32.totalorder %s54, %s55
      %p69 = scmp.eq.s32.totalorder %s21, 1
      %p70 = por %p68, %p69
      %p72 = scmp.ne.s32.totalorder %s55, %s71
      %p73 = scmp.eq.s32.totalorder %s21, 0
      %p74 = por %p72, %p73
      %s75 = ssub.s32 %s15, %s22
      %p76 = scmp.eq.s32.totalorder %s75, 0
      %s78 = sadd.s32 %s77, 1
      %s79 = scalar_select %p76, %s77, %s78
      %p82 = pneg %p76
      %p83 = scmp.eq.s32.totalorder %s15, 1
      %p84 = por %p82, %p83
      %p85 = scmp.ne.s32.totalorder %s77, %s80
      %p86 = scmp.eq.s32.totalorder %s15, 0
      %p87 = por %p85, %p86
      %p88 = scmp.ne.s32.totalorder %s77, %s80
      %p89 = scmp.eq.s32.totalorder %s20, 1
      %p90 = por %p88, %p89
      %p91 = scmp.ne.s32.totalorder %s80, %s81
      %p92 = scmp.eq.s32.totalorder %s20, 0
      %p93 = por %p91, %p92
      %p94 = scmp.ne.s32.totalorder %s80, %s81
      %p95 = scmp.eq.s32.totalorder %s21, 1
      %p96 = por %p94, %p95
      %p98 = scmp.ne.s32.totalorder %s81, %s97
      %p99 = scmp.eq.s32.totalorder %s21, 0
      %p100 = por %p98, %p99
      %p101 = scmp.le.s32.totalorder 1, %s15
      %p102 = scmp.lt.s32.totalorder %s15, 3
      %p103 = pnand %p101, %p102
      %p104 = pneg %p103
      // Predicated region
      $region9: #{tpu_custom_call.1} parent=5 // pred_check
        _
      $region10: #{tpu_custom_call.1} parent=5 // pred_check_branch
        %106 = sbr.rel (%p103) target = $region12
      $region11: #{tpu_custom_call.1} parent=5 // pred_region
        %s107 = ssub.s32 %s15, 1
      $region12: #{tpu_custom_call.1} parent=5 // pred_fallthru
        _
      %p108 = scmp.lt.s32.totalorder %s15, 2
      // Predicated region
      $region13: #{tpu_custom_call.1} parent=5 // pred_check
        %p109 = pneg %p108
      $region14: #{tpu_custom_call.1} parent=5 // pred_check_branch
        %111 = sbr.rel (%p109) target = $region16
      $region15: #{tpu_custom_call.1} parent=5 // pred_region
        // Predicated region
        $region17: #{tpu_custom_call.1} parent=15 // pred_check
          %p112 = pneg %p35
        $region18: #{tpu_custom_call.1} parent=15 // pred_check_branch
          %114 = sbr.rel (%p112) target = $region20
        $region19: #{tpu_custom_call.1} parent=15 // pred_region
          %s115 = sand.u32 %s25, 1
          %s116 = scalar_lea.sflag [#allocation3], %s115
          %s117 = sand.u32 %s25, 1
          %s118 = smul.addr %s117, 16
          %s119 = scalar_lea.vmem [#allocation2], %s118
          %s121 = ssub.s32 256, 256
          %122 = vsyncadd %s116, %s121
          %s123 = smul.addr %s15, 2
          %s124 = smul.addr %s123, 128
          %s125 = scalar_lea.hbm %s0, %s124
          %s127 = sshll.u32 %s119, 4
          %s128 = int_to_ptr.vmem [resolvable:$true] %s127
          %130 = dma.hbm_to_vmem [thread:$0]  %s125, 256, %s128, %s116
        $region20: #{tpu_custom_call.1} parent=15 // pred_fallthru
          _
      $region16: #{tpu_custom_call.1} parent=5 // pred_fallthru
        _
      %p131 = scmp.le.s32.totalorder 1, %s15
      %p132 = scmp.lt.s32.totalorder %s15, 3
      %p133 = pnand %p131, %p132
      %p134 = pneg %p133
      // Predicated region
      $region21: #{tpu_custom_call.1} parent=5 // pred_check
        _
      $region22: #{tpu_custom_call.1} parent=5 // pred_check_branch
        %136 = sbr.rel (%p133) target = $region24
      $region23: #{tpu_custom_call.1} parent=5 // pred_region
        %s137 = ssub.s32 %s15, 1
        %s138 = sand.u32 %s28, 1
        %s139 = scalar_lea.sflag [#allocation3], %s138
        %s140 = sand.u32 %s28, 1
        %s141 = smul.addr %s140, 16
        %s142 = scalar_lea.vmem [#allocation2], %s141
        // Predicated region
        $region25: #{tpu_custom_call.1} parent=23 // pred_check
          %p143 = pneg %p41
        $region26: #{tpu_custom_call.1} parent=23 // pred_check_branch
          %145 = sbr.rel (%p143) target = $region28
        $region27: #{tpu_custom_call.1} parent=23 // pred_region
          %146 = dma.done %s139, 256
        $region28: #{tpu_custom_call.1} parent=23 // pred_fallthru
          _
        %s147 = sand.u32 %s28, 1
        %s148 = scalar_lea.sflag [#allocation3], %s147
        %s149 = sand.u32 %s28, 1
        %s150 = smul.addr %s149, 16
        %s151 = scalar_lea.vmem [#allocation2], %s150
        %p152 = pneg %p41
        %p153 = pneg %p38
        %p154 = pneg %p67
        %p155 = pneg %p64
        %s156 = sand.u32 %s54, 1
        %s157 = scalar_lea.sflag [#allocation4], %s156
        %s158 = sand.u32 %s54, 1
        %s159 = smul.addr %s158, 16
        %s160 = scalar_lea.vmem [#allocation5], %s159
        %p161 = pneg %p93
        %p162 = pneg %p90
        %p163 = scmp.lt.s32.totalorder %s20, 1
        %s164 = scalar_select %p163, %s20, 1
        %s165 = smul.addr %s164, 8
        %s166 = scalar_lea.vmem %s2, %s165
        %p167 = scmp.lt.s32.totalorder %s20, 1
        %s168 = scalar_select %p167, %s20, 1
        %s169 = smul.addr %s168, 8
        %s170 = scalar_lea.vmem %s2, %s169
        %v171 = vld [vmem:[%s142] sm:$0xff]
        %v172 = vld [vmem:[%s142 + $0x8] sm:$0xff]
        %v173 = vadd.f32 %v171, %v172
        %174 = vadd.xlane.f32.xlu0 %v173
        %v175 = vpop.xlane.xlu0 %174
        %v176 = vrcp.pop %v175
        %v177 = vmul.f32 20000.0, %v176
        %v178 = vmul.f32 %v171, %v177
        %v179 = vmul.f32 %v172, %v177
        %vm180 = vcmp.eq.f32.partialorder %v175, 0.0
        %vm181 = vcmp.gt.f32.partialorder %v171, 0.0
        %vm182 = vcmp.gt.f32.partialorder %v172, 0.0
        %vm183 = vcmp.lt.f32.partialorder %v171, 0.0
        %vm184 = vcmp.lt.f32.partialorder %v172, 0.0
        %v185 = vsel %vm183, -3.4028235e+38, 0.0
        %v186 = vsel %vm184, -3.4028235e+38, 0.0
        %v187 = vsel %vm181, 3.4028235e+38, %v185
        %v188 = vsel %vm182, 3.4028235e+38, %v186
        %v189 = vsel %vm180, 1, 0
        %vm190 = vcmp.eq.s32.totalorder %v189, 1
        %v191 = vsel %vm190, %v187, %v178
        %v192 = vsel %vm190, %v188, %v179
        %193 = vst [vmem:[%s160] sm:$0xff] %v191
        %194 = vst [vmem:[%s160 + $0x8] sm:$0xff] %v192
        %vm195 = vcmask 7168
        %196 = vst.msk [vmem:[%s170] sm:$0xff] %vm195, %v177
        %s197 = sand.u32 %s54, 1
        %s198 = scalar_lea.sflag [#allocation4], %s197
        %s199 = sand.u32 %s54, 1
        %s200 = smul.addr %s199, 16
        %s201 = scalar_lea.vmem [#allocation5], %s200
        %p202 = scmp.lt.s32.totalorder %s20, 1
        %s203 = scalar_select %p202, %s20, 1
        %s204 = smul.addr %s203, 8
        %s205 = scalar_lea.vmem %s2, %s204
        // Predicated region
        $region29: #{tpu_custom_call.1} parent=23 // pred_check
          %p206 = pneg %p64
        $region30: #{tpu_custom_call.1} parent=23 // pred_check_branch
          %208 = sbr.rel (%p206) target = $region32
        $region31: #{tpu_custom_call.1} parent=23 // pred_region
          %s210 = ssub.s32 256, 256
          %211 = vsyncadd %s198, %s210
          %s212 = smul.addr %s20, 2
          %s213 = smul.addr %s212, 128
          %s214 = scalar_lea.hbm %s1, %s213
          %s216 = sshll.u32 %s201, 4
          %s217 = int_to_ptr.vmem [resolvable:$true] %s216
          %219 = dma.vmem_to_hbm [thread:$0]  %s217, 256, %s214, %s198
        $region32: #{tpu_custom_call.1} parent=23 // pred_fallthru
          _
        // Predicated region
        $region33: #{tpu_custom_call.1} parent=23 // pred_check
          %p220 = pneg %p90
        $region34: #{tpu_custom_call.1} parent=23 // pred_check_branch
          %222 = sbr.rel (%p220) target = $region36
        $region35: #{tpu_custom_call.1} parent=23 // pred_region
          _
        $region36: #{tpu_custom_call.1} parent=23 // pred_fallthru
          _
      $region24: #{tpu_custom_call.1} parent=5 // pred_fallthru
        _
      %p223 = scmp.le.s32.totalorder 2, %s15
      // Predicated region
      $region37: #{tpu_custom_call.1} parent=5 // pred_check
        %p224 = pneg %p223
      $region38: #{tpu_custom_call.1} parent=5 // pred_check_branch
        %226 = sbr.rel (%p224) target = $region40
      $region39: #{tpu_custom_call.1} parent=5 // pred_region
        %s227 = ssub.s32 %s15, 2
        // Predicated region
        $region41: #{tpu_custom_call.1} parent=39 // pred_check
          %p228 = pneg %p70
        $region42: #{tpu_custom_call.1} parent=39 // pred_check_branch
          %230 = sbr.rel (%p228) target = $region44
        $region43: #{tpu_custom_call.1} parent=39 // pred_region
          %s231 = sand.u32 %s55, 1
          %s232 = scalar_lea.sflag [#allocation4], %s231
          %s233 = sand.u32 %s55, 1
          %s234 = smul.addr %s233, 16
          %s235 = scalar_lea.vmem [#allocation5], %s234
          %236 = dma.done %s232, 256
        $region44: #{tpu_custom_call.1} parent=39 // pred_fallthru
          _
        // Predicated region
        $region45: #{tpu_custom_call.1} parent=39 // pred_check
          %p237 = pneg %p96
        $region46: #{tpu_custom_call.1} parent=39 // pred_check_branch
          %239 = sbr.rel (%p237) target = $region48
        $region47: #{tpu_custom_call.1} parent=39 // pred_region
          %p240 = scmp.lt.s32.totalorder %s21, 1
          %s241 = scalar_select %p240, %s21, 1
          %s242 = smul.addr %s241, 8
          %s243 = scalar_lea.vmem %s2, %s242
        $region48: #{tpu_custom_call.1} parent=39 // pred_fallthru
          _
      $region40: #{tpu_custom_call.1} parent=5 // pred_fallthru
        _
    $region6: #{tpu_custom_call.1} parent=1 // loop_footer
      %s19 = sadd.s32 1, %s15
    $region7: #{tpu_custom_call.1} parent=1 // loop_footer_branch
      %14 = sbr.rel target = $region3
    $region8: #{tpu_custom_call.1} parent=1 // loop_exit
      _
    %244 = vsyncpa [#allocation3], 1
    %s245 = scalar_lea.sflag [#allocation3], 1
    %246 = vsyncpa %s245, 1
    %247 = vsyncpa [#allocation4], 1
    %s248 = scalar_lea.sflag [#allocation4], 1
    %249 = vsyncpa %s248, 1

</llo_original>
